<compile_context>
chip_gen: v5e
topology: v5e:2x2
jax: 0.10.0
libtpu: 0.0.40
codegen_flags: <defaults>
</compile_context>

<pallas_src>
import jax
import jax.numpy as jnp
from jax.experimental import pallas as pl
from jax.experimental.pallas import tpu as pltpu


def _pxcorr_ca_kernel(kern_ref, srch_ref, w1t_ref, b1_ref, w2t_ref, b2_ref, out_ref):
    Bt, K, C = kern_ref.shape
    S = srch_ref.shape[-1]

    # Pixelwise cross-correlation, batched over the Bt batches of this step (MXU):
    #   feat[b, k, s] = sum_c kern[b, k, c] * srch[b, c, s]
    feat = jnp.einsum(
        "bkc,bcs->bks", kern_ref[...], srch_ref[...],
        preferred_element_type=jnp.float32)                           # (Bt, K, S) f32

    # CAModule: AdaptiveAvgPool2d(1) == mean over the spatial axis S.
    avg = jnp.mean(feat, axis=-1)                                     # (Bt, K)

    # 1x1 conv (K->K) + ReLU, then 1x1 conv (K->K) + sigmoid.
    # Batched so the MXU matmul is (Bt, K) x (K, K) instead of N=1 matvecs.
    h1 = jnp.dot(avg, w1t_ref[...], preferred_element_type=jnp.float32) + b1_ref[...]
    h1 = jnp.maximum(h1, 0.0)                                         # (Bt, K)
    att = jnp.dot(h1, w2t_ref[...], preferred_element_type=jnp.float32) + b2_ref[...]
    att = jax.nn.sigmoid(att)                                         # (Bt, K)

    # Channel-wise re-scaling of the correlation feature.
    scaled = feat * att[:, :, None]                                   # (Bt, K, S)

    # Lane-dense packed store: batches packed along the lane (last) axis so the
    # kernel-visible output last dim is Bt*S (>= 128 for the default config).
    for b in range(Bt):                                               # static unroll
        out_ref[0, :, b * S:(b + 1) * S] = scaled[b].astype(out_ref.dtype)


def pixelwise_xcorr(kernel, search, w1, b1, w2, b2, *,
                    batch_block=None, matmul_dtype=None):
    """kernel: (B, C, Hk, Wk), search: (B, C, Hs, Ws)  ->  (B, Hk*Wk, Hs, Ws)."""
    B, C, Hk, Wk = kernel.shape
    Bs, Cs, Hs, Ws = search.shape
    assert B == Bs and C == Cs
    K = Hk * Wk            # correlation channels == CA_channels
    S = Hs * Ws
    out_dtype = search.dtype

    # Batches per grid step: amortize per-step pipeline overhead, but keep >= 2
    # grid steps (marked "parallel") so both v7x TensorCores get work.
    if batch_block is None:
        batch_block = B // 2 if (B >= 2 and B % 2 == 0) else 1
    Bt = batch_block
    assert B % Bt == 0, "batch_block must divide B"
    NB = B // Bt

    # Pre-transpose template features -> (B, K, C) so the MXU matmul needs no
    # in-kernel transpose; pre-transpose the 1x1-conv weights for avg @ W^T.
    kern_t = jnp.transpose(kernel.reshape(B, C, K), (0, 2, 1))        # (B, K, C)
    srch_f = search.reshape(B, C, S)                                  # (B, C, S)
    if matmul_dtype is not None:
        kern_t = kern_t.astype(matmul_dtype)
        srch_f = srch_f.astype(matmul_dtype)
    w1_t = jnp.transpose(w1).astype(jnp.float32)                      # (K, K)
    w2_t = jnp.transpose(w2).astype(jnp.float32)                      # (K, K)
    b1c = b1.reshape(1, K).astype(jnp.float32)
    b2c = b2.reshape(1, K).astype(jnp.float32)

    nbytes = lambda a: a.size * a.dtype.itemsize
    cost = pl.CostEstimate(
        flops=2 * B * K * C * S + 4 * B * K * K,
        transcendentals=B * K,                      # sigmoid
        bytes_accessed=(nbytes(kern_t) + nbytes(srch_f) + nbytes(w1_t)
                        + nbytes(w2_t) + nbytes(b1c) + nbytes(b2c)
                        + B * K * S * out_dtype.itemsize),
    )

    out = pl.pallas_call(
        _pxcorr_ca_kernel,
        out_shape=jax.ShapeDtypeStruct((NB, K, Bt * S), out_dtype),
        grid_spec=pltpu.PrefetchScalarGridSpec(
            num_scalar_prefetch=0,
            grid=(NB,),
            in_specs=[
                pl.BlockSpec((Bt, K, C), lambda i: (i, 0, 0)),   # template feats (B,K,C)
                pl.BlockSpec((Bt, C, S), lambda i: (i, 0, 0)),   # search feats   (B,C,S)
                pl.BlockSpec((K, K), lambda i: (0, 0)),          # fc1 weight^T
                pl.BlockSpec((1, K), lambda i: (0, 0)),          # fc1 bias
                pl.BlockSpec((K, K), lambda i: (0, 0)),          # fc2 weight^T
                pl.BlockSpec((1, K), lambda i: (0, 0)),          # fc2 bias
            ],
            out_specs=pl.BlockSpec((1, K, Bt * S), lambda i: (i, 0, 0)),
        ),
        compiler_params=pltpu.CompilerParams(dimension_semantics=("parallel",)),
        cost_estimate=cost,
    )(kern_t, srch_f, w1_t, b1c, w2_t, b2c)

    # Unpack the lane-packed batches: (NB, K, Bt*S) -> (B, K, Hs, Ws).
    out = out.reshape(NB, K, Bt, S)
    out = jnp.transpose(out, (0, 2, 1, 3))                            # (NB, Bt, K, S)
    return out.reshape(B, K, Hs, Ws)


def _reference(kernel, search, w1, b1, w2, b2):
    """Pure-JAX reference mirroring the PyTorch forward."""
    B, C, Hk, Wk = kernel.shape
    _, _, Hs, Ws = search.shape
    K, S = Hk * Wk, Hs * Ws
    km = jnp.transpose(kernel.reshape(B, C, K), (0, 2, 1))            # (B, K, C)
    xm = search.reshape(B, C, S)                                      # (B, C, S)
    feat = jnp.matmul(km, xm)                                         # (B, K, S)
    avg = feat.mean(axis=-1)                                          # (B, K)
    h1 = jnp.maximum(avg @ w1.T + b1, 0.0)
    att = jax.nn.sigmoid(h1 @ w2.T + b2)                              # (B, K)
    return (feat * att[:, :, None]).reshape(B, K, Hs, Ws)


if __name__ == "__main__":
    # Small shapes consistent with the module: CA_channels = Hk*Wk.
    B, C = 4, 32
    Hk = Wk = 4          # template spatial -> K = 16 correlation channels
    Hs = Ws = 8          # search spatial   -> S = 64
    K = Hk * Wk

    key = jax.random.PRNGKey(0)
    k_kern, k_srch, kw1, kb1, kw2, kb2 = jax.random.split(key, 6)

    kernel = jax.random.normal(k_kern, (B, C, Hk, Wk), dtype=jnp.float32)
    search = jax.random.normal(k_srch, (B, C, Hs, Ws), dtype=jnp.float32)

    # Deterministic CAModule parameters (1x1 convs, reduction=1 -> K x K).
    w1 = 0.1 * jax.random.normal(kw1, (K, K), dtype=jnp.float32)
    b1 = 0.1 * jax.random.normal(kb1, (K,), dtype=jnp.float32)
    w2 = 0.1 * jax.random.normal(kw2, (K, K), dtype=jnp.float32)
    b2 = 0.1 * jax.random.normal(kb2, (K,), dtype=jnp.float32)

    ref = _reference(kernel, search, w1, b1, w2, b2)

    # f32 MXU operands (default): tight correctness check.
    out = jax.block_until_ready(pixelwise_xcorr(kernel, search, w1, b1, w2, b2))
    assert out.shape == (B, K, Hs, Ws)
    assert jnp.allclose(out, ref, atol=1e-3, rtol=1e-3), "f32 mismatch vs reference"

    # bf16 MXU operands (v6e/v7x fast path), f32 accumulation: loose check.
    out_bf16 = jax.block_until_ready(
        pixelwise_xcorr(kernel, search, w1, b1, w2, b2, matmul_dtype=jnp.bfloat16))
    assert out_bf16.shape == (B, K, Hs, Ws)
    assert jnp.allclose(out_bf16, ref, atol=1e-1, rtol=1e-1), "bf16 mismatch vs reference"

    print("KERNEL_OK")
</pallas_src>

<mosaic_0001>
module attributes {stable_mosaic.version = 11 : i64} {
  func.func @_pxcorr_ca_kernel(%arg0: i32, %arg1: memref<2x16x32xf32, #tpu.memory_space<vmem>>, %arg2: memref<2x32x64xf32, #tpu.memory_space<vmem>>, %arg3: memref<16x16xf32, #tpu.memory_space<vmem>>, %arg4: memref<1x16xf32, #tpu.memory_space<vmem>>, %arg5: memref<16x16xf32, #tpu.memory_space<vmem>>, %arg6: memref<1x16xf32, #tpu.memory_space<vmem>>, %arg7: memref<1x16x128xf32, #tpu.memory_space<vmem>>) attributes {dimension_semantics = [#tpu.dimension_semantics<parallel>], iteration_bounds = array<i64: 2>, scalar_prefetch = 0 : i64, scratch_operands = 0 : i64, tpu.core_type = #tpu.core_type<tc>, window_params = [{transform_indices = @transform_0, window_bounds = array<i64: 2, 16, 32>}, {transform_indices = @transform_1, window_bounds = array<i64: 2, 32, 64>}, {pipeline_mode = #tpu.pipeline_mode<synchronous>, transform_indices = @transform_2, window_bounds = array<i64: 16, 16>}, {pipeline_mode = #tpu.pipeline_mode<synchronous>, transform_indices = @transform_3, window_bounds = array<i64: 1, 16>}, {pipeline_mode = #tpu.pipeline_mode<synchronous>, transform_indices = @transform_4, window_bounds = array<i64: 16, 16>}, {pipeline_mode = #tpu.pipeline_mode<synchronous>, transform_indices = @transform_5, window_bounds = array<i64: 1, 16>}, {transform_indices = @transform_6, window_bounds = array<i64: 1, 16, 128>}]} {
    %c0 = arith.constant 0 : index
    %c0_0 = arith.constant 0 : index
    %c0_1 = arith.constant 0 : index
    %0 = vector.load %arg1[%c0, %c0_0, %c0_1] : memref<2x16x32xf32, #tpu.memory_space<vmem>>, vector<2x16x32xf32>
    %c0_2 = arith.constant 0 : index
    %c0_3 = arith.constant 0 : index
    %c0_4 = arith.constant 0 : index
    %1 = vector.load %arg2[%c0_2, %c0_3, %c0_4] : memref<2x32x64xf32, #tpu.memory_space<vmem>>, vector<2x32x64xf32>
    "tpu.trace_start"() <{level = 10 : i32, message = "bkc,bcs->bks"}> : () -> ()
    %cst = arith.constant dense<0.000000e+00> : vector<2x16x64xf32>
    %2 = tpu.matmul %0, %1, %cst {dimension_numbers = #tpu.dot_dimension_numbers<[2], [1], [1], [2], [0, 0, 0, 1, 1, 2], [0], [0]>} : vector<2x16x32xf32>, vector<2x32x64xf32>, vector<2x16x64xf32> -> vector<2x16x64xf32>
    "tpu.trace_stop"() : () -> ()
    %cst_5 = arith.constant dense<0.000000e+00> : vector<2x16xf32>
    %3 = vector.multi_reduction <add>, %2, %cst_5 [2] : vector<2x16x64xf32> to vector<2x16xf32>
    %cst_6 = arith.constant 6.400000e+01 : f32
    %4 = vector.broadcast %cst_6 : f32 to vector<2x16xf32>
    %5 = arith.divf %3, %4 : vector<2x16xf32>
    %c0_7 = arith.constant 0 : index
    %c0_8 = arith.constant 0 : index
    %6 = vector.load %arg3[%c0_7, %c0_8] : memref<16x16xf32, #tpu.memory_space<vmem>>, vector<16x16xf32>
    %cst_9 = arith.constant dense<0.000000e+00> : vector<2x16xf32>
    %7 = tpu.matmul %5, %6, %cst_9 {dimension_numbers = #tpu.dot_dimension_numbers<[1], [0], [0], [1], [0, 0, 1, 1], [], []>} : vector<2x16xf32>, vector<16x16xf32>, vector<2x16xf32> -> vector<2x16xf32>
    %c0_10 = arith.constant 0 : index
    %c0_11 = arith.constant 0 : index
    %8 = vector.load %arg4[%c0_10, %c0_11] : memref<1x16xf32, #tpu.memory_space<vmem>>, vector<1x16xf32>
    %9 = vector.broadcast %8 : vector<1x16xf32> to vector<2x16xf32>
    %10 = arith.addf %7, %9 : vector<2x16xf32>
    %cst_12 = arith.constant 0.000000e+00 : f32
    %11 = vector.broadcast %cst_12 : f32 to vector<2x16xf32>
    %12 = arith.maximumf %10, %11 : vector<2x16xf32>
    %c0_13 = arith.constant 0 : index
    %c0_14 = arith.constant 0 : index
    %13 = vector.load %arg5[%c0_13, %c0_14] : memref<16x16xf32, #tpu.memory_space<vmem>>, vector<16x16xf32>
    %cst_15 = arith.constant dense<0.000000e+00> : vector<2x16xf32>
    %14 = tpu.matmul %12, %13, %cst_15 {dimension_numbers = #tpu.dot_dimension_numbers<[1], [0], [0], [1], [0, 0, 1, 1], [], []>} : vector<2x16xf32>, vector<16x16xf32>, vector<2x16xf32> -> vector<2x16xf32>
    %c0_16 = arith.constant 0 : index
    %c0_17 = arith.constant 0 : index
    %15 = vector.load %arg6[%c0_16, %c0_17] : memref<1x16xf32, #tpu.memory_space<vmem>>, vector<1x16xf32>
    %16 = vector.broadcast %15 : vector<1x16xf32> to vector<2x16xf32>
    %17 = arith.addf %14, %16 : vector<2x16xf32>
    %18 = arith.negf %17 : vector<2x16xf32>
    %19 = math.exp %18 : vector<2x16xf32>
    %cst_18 = arith.constant 1.000000e+00 : f32
    %20 = vector.broadcast %cst_18 : f32 to vector<2x16xf32>
    %21 = arith.addf %20, %19 : vector<2x16xf32>
    %22 = arith.divf %20, %21 : vector<2x16xf32>
    %23 = vector.shape_cast %22 : vector<2x16xf32> to vector<2x16x1xf32>
    %24 = vector.broadcast %23 : vector<2x16x1xf32> to vector<2x16x64xf32>
    %25 = arith.mulf %2, %24 : vector<2x16x64xf32>
    %26 = vector.extract_strided_slice %25 {offsets = [0, 0, 0], sizes = [1, 16, 64], strides = [1, 1, 1]} : vector<2x16x64xf32> to vector<1x16x64xf32>
    %27 = vector.shape_cast %26 : vector<1x16x64xf32> to vector<16x64xf32>
    %c0_19 = arith.constant 0 : index
    %c0_20 = arith.constant 0 : index
    %c0_21 = arith.constant 0 : index
    %28 = vector.load %arg7[%c0_19, %c0_20, %c0_21] : memref<1x16x128xf32, #tpu.memory_space<vmem>>, vector<1x16x64xf32>
    %29 = vector.shape_cast %28 : vector<1x16x64xf32> to vector<16x64xf32>
    %30 = vector.shape_cast %27 : vector<16x64xf32> to vector<1x16x64xf32>
    tpu.vector_store %arg7[%c0_19, %c0_20, %c0_21], %30 {strides = array<i32>} : memref<1x16x128xf32, #tpu.memory_space<vmem>>, vector<1x16x64xf32>,
    %31 = vector.extract_strided_slice %25 {offsets = [1, 0, 0], sizes = [1, 16, 64], strides = [1, 1, 1]} : vector<2x16x64xf32> to vector<1x16x64xf32>
    %32 = vector.shape_cast %31 : vector<1x16x64xf32> to vector<16x64xf32>
    %c0_22 = arith.constant 0 : index
    %c0_23 = arith.constant 0 : index
    %c64 = arith.constant 64 : index
    %33 = vector.load %arg7[%c0_22, %c0_23, %c64] : memref<1x16x128xf32, #tpu.memory_space<vmem>>, vector<1x16x64xf32>
    %34 = vector.shape_cast %33 : vector<1x16x64xf32> to vector<16x64xf32>
    %35 = vector.shape_cast %32 : vector<16x64xf32> to vector<1x16x64xf32>
    tpu.vector_store %arg7[%c0_22, %c0_23, %c64], %35 {strides = array<i32>} : memref<1x16x128xf32, #tpu.memory_space<vmem>>, vector<1x16x64xf32>,
    return
  }
  func.func @transform_0(%arg0: i32) -> (i32, i32, i32) {
    %c0_i32 = arith.constant 0 : i32
    %c0_i32_0 = arith.constant 0 : i32
    %c0_i32_1 = arith.constant 0 : i32
    return %arg0, %c0_i32, %c0_i32_0 : i32, i32, i32
  }
  func.func @transform_1(%arg0: i32) -> (i32, i32, i32) {
    %c0_i32 = arith.constant 0 : i32
    %c0_i32_0 = arith.constant 0 : i32
    %c0_i32_1 = arith.constant 0 : i32
    return %arg0, %c0_i32, %c0_i32_0 : i32, i32, i32
  }
  func.func @transform_2(%arg0: i32) -> (i32, i32) {
    %c0_i32 = arith.constant 0 : i32
    %c0_i32_0 = arith.constant 0 : i32
    %c0_i32_1 = arith.constant 0 : i32
    return %c0_i32, %c0_i32_0 : i32, i32
  }
  func.func @transform_3(%arg0: i32) -> (i32, i32) {
    %c0_i32 = arith.constant 0 : i32
    %c0_i32_0 = arith.constant 0 : i32
    %c0_i32_1 = arith.constant 0 : i32
    return %c0_i32, %c0_i32_0 : i32, i32
  }
  func.func @transform_4(%arg0: i32) -> (i32, i32) {
    %c0_i32 = arith.constant 0 : i32
    %c0_i32_0 = arith.constant 0 : i32
    %c0_i32_1 = arith.constant 0 : i32
    return %c0_i32, %c0_i32_0 : i32, i32
  }
  func.func @transform_5(%arg0: i32) -> (i32, i32) {
    %c0_i32 = arith.constant 0 : i32
    %c0_i32_0 = arith.constant 0 : i32
    %c0_i32_1 = arith.constant 0 : i32
    return %c0_i32, %c0_i32_0 : i32, i32
  }
  func.func @transform_6(%arg0: i32) -> (i32, i32, i32) {
    %c0_i32 = arith.constant 0 : i32
    %c0_i32_0 = arith.constant 0 : i32
    %c0_i32_1 = arith.constant 0 : i32
    return %arg0, %c0_i32, %c0_i32_0 : i32, i32, i32
  }
}

</mosaic_0001>

<llo_original>
// kernel: tpu_custom_call.1
$region0: #{tpu_custom_call.1}
  #allocation0 [shape = 'u32[]', space=smem, size = 0x4, offset = 0x4, fixed_abs, tag = 'smem constant byte address 0x4 - core index']
  #allocation1 [shape = 'u32[72,128]{1,0:T(1,128)}', space=vmem, size = 0x9000, scoped, tag = 'internal scratch']
  %s0 = inlined_call_operand.hbm [shape: f32[4,16,32], index: 0, kind: input, shape index: {}]
  %s1 = inlined_call_operand.hbm [shape: f32[4,32,64], index: 1, kind: input, shape index: {}]
  %s2 = inlined_call_operand.hbm [shape: f32[16,16], index: 2, kind: input, shape index: {}]
  %s3 = inlined_call_operand.vmem [shape: f32[1,16], index: 3, kind: input, shape index: {}]
  %s4 = inlined_call_operand.hbm [shape: f32[16,16], index: 4, kind: input, shape index: {}]
  %s5 = inlined_call_operand.vmem [shape: f32[1,16], index: 5, kind: input, shape index: {}]
  %s6 = inlined_call_operand.hbm [shape: f32[2,16,128], index: 6, kind: output, shape index: {}]
  %s7 = sld [smem:[#allocation0]]
  $region73: #{tpu_custom_call.1} parent=0
    _
  %s9 = ssub.s32 1, %s7
  %s10 = scalar_select 0, %s9, %s7
  $region1: #{tpu_custom_call.1} parent=0
    #allocation2 [shape = 'u8[32768]{0}', space=vmem, size = 0x8000, scoped, tag = 'input window, operand 0']
    #allocation3 [shape = 's32[2]{0}', space=sflag, size = 0x8, scoped, tag = 'scoped memory for tpu_custom_call.1']
    #allocation4 [shape = 's32[2]{0}', space=sflag, size = 0x8, scoped, tag = 'scoped memory for tpu_custom_call.1']
    #allocation5 [shape = 'u8[65536]{0}', space=vmem, size = 0x10000, scoped, tag = 'input window, operand 1']
    #allocation6 [shape = 's32[2]{0}', space=sflag, size = 0x8, scoped, tag = 'scoped memory for tpu_custom_call.1']
    #allocation7 [shape = 'u8[8192]{0}', space=vmem, size = 0x2000, scoped, tag = 'input window, operand 2, single buffered']
    #allocation8 [shape = 'u8[8192]{0}', space=vmem, size = 0x2000, scoped, tag = 'input window, operand 4, single buffered']
    #allocation9 [shape = 's32[1]{0}', space=sflag, size = 0x4, scoped, tag = 'scoped memory for tpu_custom_call.1']
    #allocation10 [shape = 'u8[16384]{0}', space=vmem, size = 0x4000, scoped, tag = 'output window, operand 0']
    %11 = vsyncpa [#allocation3], 0
    %s12 = scalar_lea.sflag [#allocation3], 1
    %13 = vsyncpa %s12, 0
    %14 = vsyncpa [#allocation6], 0
    %s15 = scalar_lea.sflag [#allocation6], 1
    %16 = vsyncpa %s15, 0
    %17 = vsyncpa [#allocation9], 0
    %18 = vsyncpa [#allocation4], 0
    %s19 = scalar_lea.sflag [#allocation4], 1
    %20 = vsyncpa %s19, 0
    loop: start=0, step=1, limit=4
    $region2: #{tpu_custom_call.1} parent=1 // loop_pre_header
      _
    $region3: #{tpu_custom_call.1} parent=1 // loop_header
      %s22 = sphi 0, %s26
      %p23 = scmp.ge.s32.totalorder %s22, 4
      %s32 = sphi 0, %s34
      %s35 = sphi 0, %s32
      %s36 = sphi 0, %s35
      %s52 = sphi 0, %s36
      %s58 = sphi 0, %s60
      %s61 = sphi 0, %s58
      %s62 = sphi 0, %s61
      %s78 = sphi 0, %s62
      %s82 = sphi 0, %s82
      %s84 = sphi 0, %s82
      %s85 = sphi 0, %s84
      %s99 = sphi 0, %s85
      %s103 = sphi 0, %s103
      %s105 = sphi 0, %s103
      %s106 = sphi 0, %s105
      %s120 = sphi 0, %s106
      %s124 = sphi 0, %s124
      %s126 = sphi 0, %s124
      %s127 = sphi 0, %s126
      %s141 = sphi 0, %s127
      %s145 = sphi 0, %s145
      %s147 = sphi 0, %s145
      %s148 = sphi 0, %s147
      %s162 = sphi 0, %s148
      %s168 = sphi 0, %s170
      %s171 = sphi 0, %s168
      %s172 = sphi 0, %s171
      %s188 = sphi 0, %s172
    $region4: #{tpu_custom_call.1} parent=1 // loop_header_branch
      %25 = sbr.rel (%p23) target = $region8
    $region5: #{tpu_custom_call.1} parent=1 // loop_body
      %s27 = ssub.s32 %s22, 1
      %s28 = ssub.s32 %s22, 2
      %s29 = sadd.s32 %s22, 1
      %s30 = ssub.s32 %s22, %s29
      %p31 = scmp.eq.s32.totalorder %s30, 0
      %s33 = sadd.s32 %s32, 1
      %s34 = scalar_select %p31, %s32, %s33
      %p37 = pneg %p31
      %p38 = scmp.eq.s32.totalorder %s22, 1
      %p39 = por %p37, %p38
      %p40 = scmp.ne.s32.totalorder %s32, %s35
      %p41 = scmp.eq.s32.totalorder %s22, 0
      %p42 = por %p40, %p41
      %p43 = scmp.ne.s32.totalorder %s32, %s35
      %p44 = scmp.eq.s32.totalorder %s27, 1
      %p45 = por %p43, %p44
      %p46 = scmp.ne.s32.totalorder %s35, %s36
      %p47 = scmp.eq.s32.totalorder %s27, 0
      %p48 = por %p46, %p47
      %p49 = scmp.ne.s32.totalorder %s35, %s36
      %p50 = scmp.eq.s32.totalorder %s28, 1
      %p51 = por %p49, %p50
      %p53 = scmp.ne.s32.totalorder %s36, %s52
      %p54 = scmp.eq.s32.totalorder %s28, 0
      %p55 = por %p53, %p54
      %s56 = ssub.s32 %s22, %s29
      %p57 = scmp.eq.s32.totalorder %s56, 0
      %s59 = sadd.s32 %s58, 1
      %s60 = scalar_select %p57, %s58, %s59
      %p63 = pneg %p57
      %p64 = scmp.eq.s32.totalorder %s22, 1
      %p65 = por %p63, %p64
      %p66 = scmp.ne.s32.totalorder %s58, %s61
      %p67 = scmp.eq.s32.totalorder %s22, 0
      %p68 = por %p66, %p67
      %p69 = scmp.ne.s32.totalorder %s58, %s61
      %p70 = scmp.eq.s32.totalorder %s27, 1
      %p71 = por %p69, %p70
      %p72 = scmp.ne.s32.totalorder %s61, %s62
      %p73 = scmp.eq.s32.totalorder %s27, 0
      %p74 = por %p72, %p73
      %p75 = scmp.ne.s32.totalorder %s61, %s62
      %p76 = scmp.eq.s32.totalorder %s28, 1
      %p77 = por %p75, %p76
      %p79 = scmp.ne.s32.totalorder %s62, %s78
      %p80 = scmp.eq.s32.totalorder %s28, 0
      %p81 = por %p79, %p80
      %s83 = sadd.s32 %s82, 1
      %p86 = scmp.eq.s32.totalorder %s22, 1
      %p87 = scmp.ne.s32.totalorder %s82, %s84
      %p88 = scmp.eq.s32.totalorder %s22, 0
      %p89 = por %p87, %p88
      %p90 = scmp.ne.s32.totalorder %s82, %s84
      %p91 = scmp.eq.s32.totalorder %s27, 1
      %p92 = por %p90, %p91
      %p93 = scmp.ne.s32.totalorder %s84, %s85
      %p94 = scmp.eq.s32.totalorder %s27, 0
      %p95 = por %p93, %p94
      %p96 = scmp.ne.s32.totalorder %s84, %s85
      %p97 = scmp.eq.s32.totalorder %s28, 1
      %p98 = por %p96, %p97
      %p100 = scmp.ne.s32.totalorder %s85, %s99
      %p101 = scmp.eq.s32.totalorder %s28, 0
      %p102 = por %p100, %p101
      %s104 = sadd.s32 %s103, 1
      %p107 = scmp.eq.s32.totalorder %s22, 1
      %p108 = scmp.ne.s32.totalorder %s103, %s105
      %p109 = scmp.eq.s32.totalorder %s22, 0
      %p110 = por %p108, %p109
      %p111 = scmp.ne.s32.totalorder %s103, %s105
      %p112 = scmp.eq.s32.totalorder %s27, 1
      %p113 = por %p111, %p112
      %p114 = scmp.ne.s32.totalorder %s105, %s106
      %p115 = scmp.eq.s32.totalorder %s27, 0
      %p116 = por %p114, %p115
      %p117 = scmp.ne.s32.totalorder %s105, %s106
      %p118 = scmp.eq.s32.totalorder %s28, 1
      %p119 = por %p117, %p118
      %p121 = scmp.ne.s32.totalorder %s106, %s120
      %p122 = scmp.eq.s32.totalorder %s28, 0
      %p123 = por %p121, %p122
      %s125 = sadd.s32 %s124, 1
      %p128 = scmp.eq.s32.totalorder %s22, 1
      %p129 = scmp.ne.s32.totalorder %s124, %s126
      %p130 = scmp.eq.s32.totalorder %s22, 0
      %p131 = por %p129, %p130
      %p132 = scmp.ne.s32.totalorder %s124, %s126
      %p133 = scmp.eq.s32.totalorder %s27, 1
      %p134 = por %p132, %p133
      %p135 = scmp.ne.s32.totalorder %s126, %s127
      %p136 = scmp.eq.s32.totalorder %s27, 0
      %p137 = por %p135, %p136
      %p138 = scmp.ne.s32.totalorder %s126, %s127
      %p139 = scmp.eq.s32.totalorder %s28, 1
      %p140 = por %p138, %p139
      %p142 = scmp.ne.s32.totalorder %s127, %s141
      %p143 = scmp.eq.s32.totalorder %s28, 0
      %p144 = por %p142, %p143
      %s146 = sadd.s32 %s145, 1
      %p149 = scmp.eq.s32.totalorder %s22, 1
      %p150 = scmp.ne.s32.totalorder %s145, %s147
      %p151 = scmp.eq.s32.totalorder %s22, 0
      %p152 = por %p150, %p151
      %p153 = scmp.ne.s32.totalorder %s145, %s147
      %p154 = scmp.eq.s32.totalorder %s27, 1
      %p155 = por %p153, %p154
      %p156 = scmp.ne.s32.totalorder %s147, %s148
      %p157 = scmp.eq.s32.totalorder %s27, 0
      %p158 = por %p156, %p157
      %p159 = scmp.ne.s32.totalorder %s147, %s148
      %p160 = scmp.eq.s32.totalorder %s28, 1
      %p161 = por %p159, %p160
      %p163 = scmp.ne.s32.totalorder %s148, %s162
      %p164 = scmp.eq.s32.totalorder %s28, 0
      %p165 = por %p163, %p164
      %s166 = ssub.s32 %s22, %s29
      %p167 = scmp.eq.s32.totalorder %s166, 0
      %s169 = sadd.s32 %s168, 1
      %s170 = scalar_select %p167, %s168, %s169
      %p173 = pneg %p167
      %p174 = scmp.eq.s32.totalorder %s22, 1
      %p175 = por %p173, %p174
      %p176 = scmp.ne.s32.totalorder %s168, %s171
      %p177 = scmp.eq.s32.totalorder %s22, 0
      %p178 = por %p176, %p177
      %p179 = scmp.ne.s32.totalorder %s168, %s171
      %p180 = scmp.eq.s32.totalorder %s27, 1
      %p181 = por %p179, %p180
      %p182 = scmp.ne.s32.totalorder %s171, %s172
      %p183 = scmp.eq.s32.totalorder %s27, 0
      %p184 = por %p182, %p183
      %p185 = scmp.ne.s32.totalorder %s171, %s172
      %p186 = scmp.eq.s32.totalorder %s28, 1
      %p187 = por %p185, %p186
      %p189 = scmp.ne.s32.totalorder %s172, %s188
      %p190 = scmp.eq.s32.totalorder %s28, 0
      %p191 = por %p189, %p190
      %p192 = scmp.le.s32.totalorder 1, %s22
      %p193 = scmp.lt.s32.totalorder %s22, 3
      %p194 = pnand %p192, %p193
      %p195 = pneg %p194
      // Predicated region
      $region9: #{tpu_custom_call.1} parent=5 // pred_check
        _
      $region10: #{tpu_custom_call.1} parent=5 // pred_check_branch
        %197 = sbr.rel (%p194) target = $region12
      $region11: #{tpu_custom_call.1} parent=5 // pred_region
        %s198 = ssub.s32 %s22, 1
        // Predicated region
        $region13: #{tpu_custom_call.1} parent=11 // pred_check
          %p199 = pneg %p95
        $region14: #{tpu_custom_call.1} parent=11 // pred_check_branch
          %201 = sbr.rel (%p199) target = $region16
        $region15: #{tpu_custom_call.1} parent=11 // pred_region
          %203 = vsyncadd [#allocation6], 0
          %s204 = sshll.u32 %s2, 4
          %s205 = int_to_ptr.hbm [resolvable:$true] %s204
          %s206 = sshll.u32 [#allocation7], 4
          %s207 = int_to_ptr.vmem [resolvable:$true] %s206
          %212 = dma.hbm_to_vmem [thread:$0]  %s205, 256, %s207, [#allocation6], 128, 128, 8
        $region16: #{tpu_custom_call.1} parent=11 // pred_fallthru
          _
        // Predicated region
        $region17: #{tpu_custom_call.1} parent=11 // pred_check
          %p213 = pneg %p116
        $region18: #{tpu_custom_call.1} parent=11 // pred_check_branch
          %215 = sbr.rel (%p213) target = $region20
        $region19: #{tpu_custom_call.1} parent=11 // pred_region
          _
        $region20: #{tpu_custom_call.1} parent=11 // pred_fallthru
          _
        // Predicated region
        $region21: #{tpu_custom_call.1} parent=11 // pred_check
          %p216 = pneg %p137
        $region22: #{tpu_custom_call.1} parent=11 // pred_check_branch
          %218 = sbr.rel (%p216) target = $region24
        $region23: #{tpu_custom_call.1} parent=11 // pred_region
          %220 = vsyncadd [#allocation9], 0
          %s221 = sshll.u32 %s4, 4
          %s222 = int_to_ptr.hbm [resolvable:$true] %s221
          %s223 = sshll.u32 [#allocation8], 4
          %s224 = int_to_ptr.vmem [resolvable:$true] %s223
          %229 = dma.hbm_to_vmem [thread:$0]  %s222, 256, %s224, [#allocation9], 128, 128, 8
        $region24: #{tpu_custom_call.1} parent=11 // pred_fallthru
          _
        // Predicated region
        $region25: #{tpu_custom_call.1} parent=11 // pred_check
          %p230 = pneg %p158
        $region26: #{tpu_custom_call.1} parent=11 // pred_check_branch
          %232 = sbr.rel (%p230) target = $region28
        $region27: #{tpu_custom_call.1} parent=11 // pred_region
          _
        $region28: #{tpu_custom_call.1} parent=11 // pred_fallthru
          _
      $region12: #{tpu_custom_call.1} parent=5 // pred_fallthru
        _
      %p233 = scmp.lt.s32.totalorder %s22, 2
      // Predicated region
      $region29: #{tpu_custom_call.1} parent=5 // pred_check
        %p234 = pneg %p233
      $region30: #{tpu_custom_call.1} parent=5 // pred_check_branch
        %236 = sbr.rel (%p234) target = $region32
      $region31: #{tpu_custom_call.1} parent=5 // pred_region
        // Predicated region
        $region33: #{tpu_custom_call.1} parent=31 // pred_check
          %p237 = pneg %p42
        $region34: #{tpu_custom_call.1} parent=31 // pred_check_branch
          %239 = sbr.rel (%p237) target = $region36
        $region35: #{tpu_custom_call.1} parent=31 // pred_region
          %s240 = sand.u32 %s32, 1
          %s241 = scalar_lea.sflag [#allocation3], %s240
          %s242 = sand.u32 %s32, 1
          %s243 = smul.addr %s242, 32
          %s244 = scalar_lea.vmem [#allocation2], %s243
          %s245 = smul.u32 2, %s22
          %247 = vsyncadd %s241, 0
          %s248 = smul.addr %s245, 2
          %s249 = smul.addr %s248, 8
          %s250 = scalar_lea.hbm %s0, %s249
          %s251 = sshll.u32 %s250, 4
          %s252 = int_to_ptr.hbm [resolvable:$true] %s251
          %s253 = sshll.u32 %s244, 4
          %s254 = int_to_ptr.vmem [resolvable:$true] %s253
          %259 = dma.hbm_to_vmem [thread:$0]  %s252, 512, %s254, %s241, 128, 128, 8
        $region36: #{tpu_custom_call.1} parent=31 // pred_fallthru
          _
        // Predicated region
        $region37: #{tpu_custom_call.1} parent=31 // pred_check
          %p260 = pneg %p68
        $region38: #{tpu_custom_call.1} parent=31 // pred_check_branch
          %262 = sbr.rel (%p260) target = $region40
        $region39: #{tpu_custom_call.1} parent=31 // pred_region
          %s263 = sand.u32 %s22, 1
          %s264 = scalar_lea.sflag [#allocation6], %s263
          %s265 = sand.u32 %s58, 1
          %s266 = smul.addr %s265, 64
          %s267 = scalar_lea.vmem [#allocation5], %s266
          %s268 = smul.u32 2, %s22
          %270 = vsyncadd %s264, 0
          %s271 = smul.addr %s268, 4
          %s272 = smul.addr %s271, 8
          %s273 = scalar_lea.hbm %s1, %s272
          %s274 = sshll.u32 %s273, 4
          %s275 = int_to_ptr.hbm [resolvable:$true] %s274
          %s276 = sshll.u32 %s267, 4
          %s277 = int_to_ptr.vmem [resolvable:$true] %s276
          %282 = dma.hbm_to_vmem [thread:$0]  %s275, 1024, %s277, %s264, 128, 128, 8
        $region40: #{tpu_custom_call.1} parent=31 // pred_fallthru
          _
      $region32: #{tpu_custom_call.1} parent=5 // pred_fallthru
        _
      %p283 = scmp.le.s32.totalorder 1, %s22
      %p284 = scmp.lt.s32.totalorder %s22, 3
      %p285 = pnand %p283, %p284
      %p286 = pneg %p285
      // Predicated region
      $region41: #{tpu_custom_call.1} parent=5 // pred_check
        _
      $region42: #{tpu_custom_call.1} parent=5 // pred_check_branch
        %288 = sbr.rel (%p285) target = $region44
      $region43: #{tpu_custom_call.1} parent=5 // pred_region
        %s289 = ssub.s32 %s22, 1
        %s290 = sand.u32 %s35, 1
        %s291 = scalar_lea.sflag [#allocation3], %s290
        %s292 = sand.u32 %s35, 1
        %s293 = smul.addr %s292, 32
        %s294 = scalar_lea.vmem [#allocation2], %s293
        // Predicated region
        $region45: #{tpu_custom_call.1} parent=43 // pred_check
          %p295 = pneg %p48
        $region46: #{tpu_custom_call.1} parent=43 // pred_check_branch
          %297 = sbr.rel (%p295) target = $region48
        $region47: #{tpu_custom_call.1} parent=43 // pred_region
          %299 = dma.done %s291, 512
        $region48: #{tpu_custom_call.1} parent=43 // pred_fallthru
          _
        %s300 = sand.u32 %s27, 1
        %s301 = scalar_lea.sflag [#allocation6], %s300
        %s302 = sand.u32 %s61, 1
        %s303 = smul.addr %s302, 64
        %s304 = scalar_lea.vmem [#allocation5], %s303
        // Predicated region
        $region49: #{tpu_custom_call.1} parent=43 // pred_check
          %p305 = pneg %p74
        $region50: #{tpu_custom_call.1} parent=43 // pred_check_branch
          %307 = sbr.rel (%p305) target = $region52
        $region51: #{tpu_custom_call.1} parent=43 // pred_region
          %309 = dma.done %s301, 1024
        $region52: #{tpu_custom_call.1} parent=43 // pred_fallthru
          _
        // Predicated region
        $region53: #{tpu_custom_call.1} parent=43 // pred_check
          %p310 = pneg %p95
        $region54: #{tpu_custom_call.1} parent=43 // pred_check_branch
          %312 = sbr.rel (%p310) target = $region56
        $region55: #{tpu_custom_call.1} parent=43 // pred_region
          %314 = dma.done [#allocation6], 256
        $region56: #{tpu_custom_call.1} parent=43 // pred_fallthru
          _
        // Predicated region
        $region57: #{tpu_custom_call.1} parent=43 // pred_check
          %p315 = pneg %p137
        $region58: #{tpu_custom_call.1} parent=43 // pred_check_branch
          %317 = sbr.rel (%p315) target = $region60
        $region59: #{tpu_custom_call.1} parent=43 // pred_region
          %319 = dma.done [#allocation9], 256
        $region60: #{tpu_custom_call.1} parent=43 // pred_fallthru
          _
        %s320 = sand.u32 %s35, 1
        %s321 = scalar_lea.sflag [#allocation3], %s320
        %s322 = sand.u32 %s35, 1
        %s323 = smul.addr %s322, 32
        %s324 = scalar_lea.vmem [#allocation2], %s323
        %p325 = pneg %p48
        %p326 = pneg %p45
        %s327 = sand.u32 %s27, 1
        %s328 = scalar_lea.sflag [#allocation6], %s327
        %s329 = sand.u32 %s61, 1
        %s330 = smul.addr %s329, 64
        %s331 = scalar_lea.vmem [#allocation5], %s330
        %p332 = pneg %p74
        %p333 = pneg %p71
        %p334 = pneg %p95
        %p335 = pneg %p92
        %p336 = pneg %p116
        %p337 = pneg %p113
        %p338 = pneg %p137
        %p339 = pneg %p134
        %p340 = pneg %p158
        %p341 = pneg %p155
        %p342 = pneg %p184
        %p343 = pneg %p181
        %s344 = sand.u32 %s171, 1
        %s345 = scalar_lea.sflag [#allocation4], %s344
        %s346 = sand.u32 %s171, 1
        %s347 = smul.addr %s346, 16
        %s348 = scalar_lea.vmem [#allocation10], %s347
        %s349 = smul.u32 2, %s27
        %s350 = smul.u32 2, %s27
        %v351 = vld [vmem:[%s294] sm:$0xff]
        %v352 = vld [vmem:[%s294 + $0x8] sm:$0xff]
        %v353 = vld [vmem:[%s294 + $0x10] sm:$0xff]
        %v354 = vld [vmem:[%s294 + $0x18] sm:$0xff]
        %v355 = vld [vmem:[%s304] sm:$0xff]
        %v356 = vld [vmem:[%s304 + $0x8] sm:$0xff]
        %v357 = vld [vmem:[%s304 + $0x10] sm:$0xff]
        %v358 = vld [vmem:[%s304 + $0x18] sm:$0xff]
        %v359 = vld [vmem:[%s304 + $0x20] sm:$0xff]
        %v360 = vld [vmem:[%s304 + $0x28] sm:$0xff]
        %v361 = vld [vmem:[%s304 + $0x30] sm:$0xff]
        %v362 = vld [vmem:[%s304 + $0x38] sm:$0xff]
        %vm363 = vcmask 261120
        %v365 = vsel %vm363, %v351, 0
        %v368 = vsel %vm363, %v352, 0
        %370 = vmatpush.msra.mxu0 0.0
        %371 = vmatpush.msra.mxu0 0.0
        %372 = vmatpush.msra.mxu0 0.0
        %373 = vmatpush.msra.mxu0 0.0
        %374 = vmatpush.msra.mxu0 0.0
        %375 = vmatpush.msra.mxu0 0.0
        %376 = vmatpush.msra.mxu0 0.0
        %377 = vmatpush.msra.mxu0 0.0
        %378 = vmatpush.msra.mxu0 0.0
        %379 = vmatpush.msra.mxu0 0.0
        %380 = vmatpush.msra.mxu0 0.0
        %381 = vmatpush.msra.mxu0 0.0
        %382 = vmatpush.msra.mxu0 %v358
        %383 = vmatpush.msra.mxu0 %v357
        %384 = vmatpush.msra.mxu0 %v356
        %385 = vmatpush.msra.mxu0 %v355
        %386 = vmatmul.f32.gmra.mxu0 %v365
        %v387 = vpop.f32.mrf.mxu0
        %v388 = vadd.f32 0.0, %v387
        %389 = vmatmul.f32.gmra.mxu0 %v368
        %v390 = vpop.f32.mrf.mxu0
        %v391 = vadd.f32 0.0, %v390
        %392 = vdwg.mxu0
        %v394 = vsel %vm363, %v353, 0
        %v397 = vsel %vm363, %v354, 0
        %399 = vmatpush.msra.mxu0 0.0
        %400 = vmatpush.msra.mxu0 0.0
        %401 = vmatpush.msra.mxu0 0.0
        %402 = vmatpush.msra.mxu0 0.0
        %403 = vmatpush.msra.mxu0 0.0
        %404 = vmatpush.msra.mxu0 0.0
        %405 = vmatpush.msra.mxu0 0.0
        %406 = vmatpush.msra.mxu0 0.0
        %407 = vmatpush.msra.mxu0 0.0
        %408 = vmatpush.msra.mxu0 0.0
        %409 = vmatpush.msra.mxu0 0.0
        %410 = vmatpush.msra.mxu0 0.0
        %411 = vmatpush.msra.mxu0 %v362
        %412 = vmatpush.msra.mxu0 %v361
        %413 = vmatpush.msra.mxu0 %v360
        %414 = vmatpush.msra.mxu0 %v359
        %415 = vmatmul.f32.gmra.mxu0 %v394
        %v416 = vpop.f32.mrf.mxu0
        %v417 = vadd.f32 0.0, %v416
        %418 = vmatmul.f32.gmra.mxu0 %v397
        %v419 = vpop.f32.mrf.mxu0
        %v420 = vadd.f32 0.0, %v419
        %421 = vdwg.mxu0
        %vm422 = vcmask 523264
        %v423 = vsel %vm422, %v388, 0.0
        %424 = vadd.xlane.f32.xlu0 %v423
        %v425 = vpop.xlane.xlu0 %424
        %v426 = vsel %vm422, %v391, 0.0
        %427 = vadd.xlane.f32.xlu0 %v426
        %v428 = vpop.xlane.xlu0 %427
        %v429 = vsel %vm422, %v417, 0.0
        %430 = vadd.xlane.f32.xlu0 %v429
        %v431 = vpop.xlane.xlu0 %430
        %v432 = vsel %vm422, %v420, 0.0
        %433 = vadd.xlane.f32.xlu0 %v432
        %v434 = vpop.xlane.xlu0 %433
        %v435 = vrcp.pop 64.0
        %v436 = vmul.f32 64.0, %v435
        %v437 = vsub.f32 1.0, %v436
        %v438 = vmul.f32 %v435, %v437
        %v439 = vadd.f32 %v435, %v438
        %vm440 = vweird.f32 %v435
        %v441 = vsel %vm440, %v435, %v439
        %v442 = vmul.f32 %v425, %v441
        %v443 = vmul.f32 %v428, %v441
        %v444 = vmul.f32 %v431, %v441
        %v445 = vmul.f32 %v434, %v441
        %v446 = vld [vmem:[#allocation7] sm:$0xff]
        %v447 = vld [vmem:[#allocation7 + $0x8] sm:$0xff]
        %v448 = vld [vmem:[%s3] sm:$0x1]
        %v450 = vperm.slane %v448, 0
        %v456 = vlaneseq
        %v457 = vand.u32 %v456, 127
        %v458 = vperm.slane %v442, %v457
        %v459 = vadd.s32 %v457, 4294967288
        %v460 = vperm.slane %v443, %v459
        %vm461 = vcmask 130112
        %v462 = vsel %vm461, %v460, %v458
        %v463 = vperm.slane %v444, %v457
        %v464 = vperm.slane %v445, %v459
        %v465 = vsel %vm461, %v464, %v463
        %vm466 = vcmask 1041409
        %v467 = vsel %vm466, %v465, %v462
        %vm468 = vcmask 130048
        %v469 = vsel %vm468, %v467, 0
        %471 = vmatpush.msra.mxu0 0.0
        %472 = vmatpush.msra.mxu0 0.0
        %473 = vmatpush.msra.mxu0 0.0
        %474 = vmatpush.msra.mxu0 0.0
        %475 = vmatpush.msra.mxu0 0.0
        %476 = vmatpush.msra.mxu0 0.0
        %477 = vmatpush.msra.mxu0 0.0
        %478 = vmatpush.msra.mxu0 0.0
        %479 = vmatpush.msra.mxu0 0.0
        %480 = vmatpush.msra.mxu0 0.0
        %481 = vmatpush.msra.mxu0 0.0
        %482 = vmatpush.msra.mxu0 0.0
        %483 = vmatpush.msra.mxu0 0.0
        %484 = vmatpush.msra.mxu0 0.0
        %485 = vmatpush.msra.mxu0 %v447
        %486 = vmatpush.msra.mxu0 %v446
        %487 = vmatmul.f32.gmra.mxu0 %v469
        %v488 = vpop.f32.mrf.mxu0
        %v489 = vadd.f32 %v450, %v488
        %490 = vdwg.mxu0
        %v491 = vmax.f32 %v489, 0.0
        %v492 = vld [vmem:[#allocation8] sm:$0xff]
        %v493 = vld [vmem:[#allocation8 + $0x8] sm:$0xff]
        %v494 = vld [vmem:[%s5] sm:$0x1]
        %v496 = vperm.slane %v494, 0
        %v499 = vsel %vm468, %v491, 0
        %501 = vmatpush.msra.mxu0 0.0
        %502 = vmatpush.msra.mxu0 0.0
        %503 = vmatpush.msra.mxu0 0.0
        %504 = vmatpush.msra.mxu0 0.0
        %505 = vmatpush.msra.mxu0 0.0
        %506 = vmatpush.msra.mxu0 0.0
        %507 = vmatpush.msra.mxu0 0.0
        %508 = vmatpush.msra.mxu0 0.0
        %509 = vmatpush.msra.mxu0 0.0
        %510 = vmatpush.msra.mxu0 0.0
        %511 = vmatpush.msra.mxu0 0.0
        %512 = vmatpush.msra.mxu0 0.0
        %513 = vmatpush.msra.mxu0 0.0
        %514 = vmatpush.msra.mxu0 0.0
        %515 = vmatpush.msra.mxu0 %v493
        %516 = vmatpush.msra.mxu0 %v492
        %517 = vmatmul.f32.gmra.mxu0 %v499
        %v518 = vpop.f32.mrf.mxu0
        %v519 = vadd.f32 %v496, %v518
        %520 = vdwg.mxu0
        %v521 = vxor.u32 %v519, 2147483648
        %v522 = vmul.f32 %v521, 1.442695
        %v523 = vpow.pop %v522
        %v524 = vadd.f32 %v523, 1.0
        %v525 = vrcp.pop %v524
        %v526 = vmul.f32 %v524, %v525
        %v527 = vsub.f32 1.0, %v526
        %v528 = vmul.f32 %v525, %v527
        %v529 = vadd.f32 %v525, %v528
        %vm530 = vweird.f32 %v524
        %vm531 = vweird.f32 %v525
        %vm532 = vmor %vm530, %vm531
        %v533 = vsel %vm532, %v525, %v529
        %v534 = vand.u32 2147483647, %v524
        %vm535 = vcmp.eq.f32.partialorder %v534, 8.507059e+37
        %v536 = vand.u32 %v524, 2147483648
        %v537 = vor.u32 1.1754944e-38, %v536
        %v538 = vsel %vm535, %v537, %v533
        %v539 = vmul.f32 1.0, %v538
        %v540 = vperm.slane %v539, 0
        %v541 = vlaneseq
        %v542 = vshrl.u32 %v541, 7
        %544 = vset.pattern.permute.xlu0 %v542
        %545 = vperm.xlu0 %544, %v540
        %v546 = vpop.permute.xlu0 %545
        %v547 = vlaneseq
        %v548 = vshrl.u32 %v547, 7
        %v549 = vadd.s32 %v548, 8
        %550 = vset.pattern.permute.xlu0 %v549
        %551 = vperm.xlu0 %550, %v540
        %v552 = vpop.permute.xlu0 %551
        %v553 = vperm.slane %v539, 1
        %v554 = vlaneseq
        %v555 = vshrl.u32 %v554, 7
        %557 = vset.pattern.permute.xlu0 %v555
        %558 = vperm.xlu0 %557, %v553
        %v559 = vpop.permute.xlu0 %558
        %v560 = vlaneseq
        %v561 = vshrl.u32 %v560, 7
        %v562 = vadd.s32 %v561, 8
        %563 = vset.pattern.permute.xlu0 %v562
        %564 = vperm.xlu0 %563, %v553
        %v565 = vpop.permute.xlu0 %564
        %v566 = vmul.f32 %v388, %v546
        %v567 = vmul.f32 %v391, %v552
        %v568 = vmul.f32 %v417, %v559
        %v569 = vmul.f32 %v420, %v565
        %570 = vst.msk [vmem:[%s348] sm:$0xff] %vm422, %v566
        %571 = vst.msk [vmem:[%s348 + $0x8] sm:$0xff] %vm422, %v567
        %574 = vrot.lane.b32.xlu0 %v568, 64
        %v575 = vpop.permute.xlu0 %574
        %576 = vrot.lane.b32.xlu0 %v569, 64
        %v577 = vpop.permute.xlu0 %576
        %vm580 = vcmask 1048064
        %581 = vst.msk [vmem:[%s348] sm:$0xff] %vm580, %v575
        %582 = vst.msk [vmem:[%s348 + $0x8] sm:$0xff] %vm580, %v577
        %s583 = sand.u32 %s171, 1
        %s584 = scalar_lea.sflag [#allocation4], %s583
        %s585 = sand.u32 %s171, 1
        %s586 = smul.addr %s585, 16
        %s587 = scalar_lea.vmem [#allocation10], %s586
        // Predicated region
        $region61: #{tpu_custom_call.1} parent=43 // pred_check
          %p588 = pneg %p181
        $region62: #{tpu_custom_call.1} parent=43 // pred_check_branch
          %590 = sbr.rel (%p588) target = $region64
        $region63: #{tpu_custom_call.1} parent=43 // pred_region
          %592 = vsyncadd %s584, 0
          %s593 = smul.addr %s27, 2
          %s594 = smul.addr %s593, 8
          %s595 = scalar_lea.hbm %s6, %s594
          %s596 = sshll.u32 %s587, 4
          %s597 = int_to_ptr.vmem [resolvable:$true] %s596
          %s598 = sshll.u32 %s595, 4
          %s599 = int_to_ptr.hbm [resolvable:$true] %s598
          %604 = dma.vmem_to_hbm [thread:$0]  %s597, 256, %s599, %s584, 128, 128, 8
        $region64: #{tpu_custom_call.1} parent=43 // pred_fallthru
          _
      $region44: #{tpu_custom_call.1} parent=5 // pred_fallthru
        _
      %p605 = scmp.le.s32.totalorder 2, %s22
      // Predicated region
      $region65: #{tpu_custom_call.1} parent=5 // pred_check
        %p606 = pneg %p605
      $region66: #{tpu_custom_call.1} parent=5 // pred_check_branch
        %608 = sbr.rel (%p606) target = $region68
      $region67: #{tpu_custom_call.1} parent=5 // pred_region
        %s609 = ssub.s32 %s22, 2
        // Predicated region
        $region69: #{tpu_custom_call.1} parent=67 // pred_check
          %p610 = pneg %p187
        $region70: #{tpu_custom_call.1} parent=67 // pred_check_branch
          %612 = sbr.rel (%p610) target = $region72
        $region71: #{tpu_custom_call.1} parent=67 // pred_region
          %s613 = sand.u32 %s172, 1
          %s614 = scalar_lea.sflag [#allocation4], %s613
          %s615 = sand.u32 %s172, 1
          %s616 = smul.addr %s615, 16
          %s617 = scalar_lea.vmem [#allocation10], %s616
          %619 = dma.done %s614, 256
        $region72: #{tpu_custom_call.1} parent=67 // pred_fallthru
          _
      $region68: #{tpu_custom_call.1} parent=5 // pred_fallthru
        _
    $region6: #{tpu_custom_call.1} parent=1 // loop_footer
      %s26 = sadd.s32 1, %s22
    $region7: #{tpu_custom_call.1} parent=1 // loop_footer_branch
      %21 = sbr.rel target = $region3
    $region8: #{tpu_custom_call.1} parent=1 // loop_exit
      _
    %620 = vsyncpa [#allocation3], 1
    %s621 = scalar_lea.sflag [#allocation3], 1
    %622 = vsyncpa %s621, 1
    %623 = vsyncpa [#allocation6], 1
    %s624 = scalar_lea.sflag [#allocation6], 1
    %625 = vsyncpa %s624, 1
    %626 = vsyncpa [#allocation9], 1
    %627 = vsyncpa [#allocation4], 1
    %s628 = scalar_lea.sflag [#allocation4], 1
    %629 = vsyncpa %s628, 1

</llo_original>
